<compile_context>
chip_gen: v6e
topology: v6e:2x2x1
jax: 0.10.0
libtpu: 0.0.40
codegen_flags: <defaults>
</compile_context>

<pallas_src>
import jax
import jax.numpy as jnp
from jax.experimental import pallas as pl
from jax.experimental.pallas import tpu as pltpu

D_IN = 300      # GloVe embedding dim (fixed by the module)
D_PAD = 384     # 300 padded to a multiple of 128 lanes
H_PAD = 128     # hidden units padded to full lane / MXU column width


def _round_up(v, m):
    return (v + m - 1) // m * m


def bow_kernel(x_ref, t_ref, mask_ref, w1_ref, vec_ref, b2_ref,
               logits_ref, ploss_ref):
    """One batch tile: (BN-folded) linear -> ReLU -> lane-reduce linear -> BCE terms."""
    # fc_hidden with BatchNorm (eval) folded in; bias is row 0 of the fused vector input.
    h = jnp.dot(x_ref[...], w1_ref[...], preferred_element_type=jnp.float32)
    h = h + vec_ref[0:1, :]
    h = jnp.maximum(h, 0.0)                                   # ReLU
    # dropout: identity in eval mode.
    # TODO(synk): training-mode dropout (p=0.5) would need pltpu.prng_random_bits.

    # fc_output as a lane reduction against the (1, H_PAD) weight row (row 1 of vec);
    # avoids a degenerate N=1 MXU matmul. b2 is an SMEM scalar.
    z = jnp.sum(h * vec_ref[1:2, :], axis=-1, keepdims=True) + b2_ref[0, 0]   # (TB, 1)
    logits_ref[...] = z

    # BCEWithLogitsLoss per-example terms (numerically stable form), masked so
    # batch-padding rows contribute zero; mean is taken outside the kernel.
    t = t_ref[...]
    per_ex = jnp.maximum(z, 0.0) - z * t + jnp.log1p(jnp.exp(-jnp.abs(z)))
    ploss_ref[...] = per_ex * mask_ref[...]


def bow_forward(x, t, params):
    """Returns (loss scalar, logits [B]) matching BOW_model.forward (eval mode)."""
    B = x.shape[0]
    w1, b1, gamma, beta, running_mean, running_var, w2, b2 = params
    H = w1.shape[1]

    # ---- host side: fold eval-mode BatchNorm into fc_hidden ----
    scale = gamma * jax.lax.rsqrt(running_var + 1e-5)          # (1, H)
    w1f = w1 * scale                                           # (300, H)
    b1f = (b1 - running_mean) * scale + beta                   # (1, H)

    # ---- host side: zero-pad D -> 384 and H -> 128 (padded units stay exactly 0) ----
    w1p = jnp.zeros((D_PAD, H_PAD), jnp.float32).at[:D_IN, :H].set(w1f)
    vec = jnp.zeros((2, H_PAD), jnp.float32)
    vec = vec.at[0, :H].set(b1f[0])                            # row 0: folded bias
    vec = vec.at[1, :H].set(w2[:, 0])                          # row 1: fc_output weights
    b2s = b2.reshape(1, 1).astype(jnp.float32)

    # ---- host side: pad + tile the batch dimension ----
    TB = min(512, _round_up(B, 8))                             # sublane-aligned batch tile
    Bp = _round_up(B, TB)
    n_tiles = Bp // TB
    xp = jnp.zeros((Bp, D_PAD), jnp.float32).at[:B, :D_IN].set(x)
    tp = jnp.zeros((Bp, 1), jnp.float32).at[:B, 0].set(t)
    maskp = (jnp.arange(Bp) < B).astype(jnp.float32).reshape(Bp, 1)

    logits_p, ploss_p = pl.pallas_call(
        bow_kernel,
        out_shape=(
            jax.ShapeDtypeStruct((Bp, 1), jnp.float32),        # logits (column layout)
            jax.ShapeDtypeStruct((Bp, 1), jnp.float32),        # per-example loss terms
        ),
        grid_spec=pltpu.PrefetchScalarGridSpec(
            num_scalar_prefetch=0,
            grid=(n_tiles,),
            in_specs=[
                pl.BlockSpec((TB, D_PAD), lambda i: (i, 0)),        # x tile (pipelined)
                pl.BlockSpec((TB, 1), lambda i: (i, 0)),            # targets
                pl.BlockSpec((TB, 1), lambda i: (i, 0)),            # batch-pad mask
                pl.BlockSpec((D_PAD, H_PAD), lambda i: (0, 0)),     # folded w1 (resident)
                pl.BlockSpec((2, H_PAD), lambda i: (0, 0)),         # [b1'; w2 row] (resident)
                pl.BlockSpec((1, 1), lambda i: (0, 0),
                             memory_space=pltpu.SMEM),              # b2 scalar
            ],
            out_specs=(
                pl.BlockSpec((TB, 1), lambda i: (i, 0)),
                pl.BlockSpec((TB, 1), lambda i: (i, 0)),
            ),
        ),
        compiler_params=pltpu.CompilerParams(
            dimension_semantics=("parallel",),                     # batch tiles independent
            vmem_limit_bytes=32 * 1024 * 1024,
        ),
    )(xp, tp, maskp, w1p, vec, b2s)

    loss = jnp.sum(ploss_p) / B
    logits = logits_p[:B, 0]
    return loss, logits


def init_params(key, no_of_hidden_units):
    D = D_IN
    H = no_of_hidden_units
    k = jax.random.split(key, 8)
    # weights stored as [in, out] (transposed relative to PyTorch's nn.Linear)
    w1 = jax.random.normal(k[0], (D, H), jnp.float32) * (1.0 / jnp.sqrt(D))
    b1 = jax.random.normal(k[1], (1, H), jnp.float32) * 0.01
    gamma = 1.0 + 0.1 * jax.random.normal(k[2], (1, H), jnp.float32)
    beta = 0.1 * jax.random.normal(k[3], (1, H), jnp.float32)
    running_mean = 0.1 * jax.random.normal(k[4], (1, H), jnp.float32)
    running_var = jnp.abs(1.0 + 0.1 * jax.random.normal(k[5], (1, H), jnp.float32))
    w2 = jax.random.normal(k[6], (H, 1), jnp.float32) * (1.0 / jnp.sqrt(H))
    b2 = jax.random.normal(k[7], (1, 1), jnp.float32) * 0.01
    return (w1, b1, gamma, beta, running_mean, running_var, w2, b2)


if __name__ == "__main__":
    key = jax.random.PRNGKey(0)
    k_x, k_t, k_p = jax.random.split(key, 3)

    B = 8      # batch
    H = 32     # no_of_hidden_units
    D = D_IN   # GloVe embedding dim

    x = jax.random.normal(k_x, (B, D), jnp.float32)                    # averaged GloVe BoW
    t = jax.random.bernoulli(k_t, 0.5, (B,)).astype(jnp.float32)       # binary sentiment

    params = init_params(k_p, H)

    loss, logits = jax.jit(bow_forward)(x, t, params)
    jax.block_until_ready((loss, logits))

    assert loss.shape == () and logits.shape == (B,)
    assert jnp.isfinite(loss) and jnp.all(jnp.isfinite(logits))
    print("KERNEL_OK")
</pallas_src>

<mosaic_0001>
module attributes {stable_mosaic.version = 11 : i64} {
  func.func @bow_kernel(%arg0: i32, %arg1: memref<8x384xf32, #tpu.memory_space<vmem>>, %arg2: memref<8x1xf32, #tpu.memory_space<vmem>>, %arg3: memref<8x1xf32, #tpu.memory_space<vmem>>, %arg4: memref<384x128xf32, #tpu.memory_space<vmem>>, %arg5: memref<2x128xf32, #tpu.memory_space<vmem>>, %arg6: memref<1x1xf32, #tpu.memory_space<smem>>, %arg7: memref<8x1xf32, #tpu.memory_space<vmem>>, %arg8: memref<8x1xf32, #tpu.memory_space<vmem>>) attributes {dimension_semantics = [#tpu.dimension_semantics<parallel>], iteration_bounds = array<i64: 1>, scalar_prefetch = 0 : i64, scratch_operands = 0 : i64, tpu.core_type = #tpu.core_type<tc>, window_params = [{transform_indices = @transform_0, window_bounds = array<i64: 8, 384>}, {transform_indices = @transform_1, window_bounds = array<i64: 8, 1>}, {transform_indices = @transform_2, window_bounds = array<i64: 8, 1>}, {pipeline_mode = #tpu.pipeline_mode<synchronous>, transform_indices = @transform_3, window_bounds = array<i64: 384, 128>}, {pipeline_mode = #tpu.pipeline_mode<synchronous>, transform_indices = @transform_4, window_bounds = array<i64: 2, 128>}, {transform_indices = @transform_5, window_bounds = array<i64: 1, 1>}, {transform_indices = @transform_6, window_bounds = array<i64: 8, 1>}, {transform_indices = @transform_7, window_bounds = array<i64: 8, 1>}]} {
    %c0 = arith.constant 0 : index
    %c0_0 = arith.constant 0 : index
    %0 = vector.load %arg1[%c0, %c0_0] : memref<8x384xf32, #tpu.memory_space<vmem>>, vector<8x384xf32>
    %c0_1 = arith.constant 0 : index
    %c0_2 = arith.constant 0 : index
    %1 = vector.load %arg4[%c0_1, %c0_2] : memref<384x128xf32, #tpu.memory_space<vmem>>, vector<384x128xf32>
    %cst = arith.constant dense<0.000000e+00> : vector<8x128xf32>
    %2 = tpu.matmul %0, %1, %cst {dimension_numbers = #tpu.dot_dimension_numbers<[1], [0], [0], [1], [0, 0, 1, 1], [], []>} : vector<8x384xf32>, vector<384x128xf32>, vector<8x128xf32> -> vector<8x128xf32>
    %c0_3 = arith.constant 0 : index
    %c0_4 = arith.constant 0 : index
    %3 = vector.load %arg5[%c0_3, %c0_4] : memref<2x128xf32, #tpu.memory_space<vmem>>, vector<1x128xf32>
    %4 = vector.broadcast %3 : vector<1x128xf32> to vector<8x128xf32>
    %5 = arith.addf %2, %4 : vector<8x128xf32>
    %cst_5 = arith.constant 0.000000e+00 : f32
    %6 = vector.broadcast %cst_5 : f32 to vector<8x128xf32>
    %7 = arith.maximumf %5, %6 : vector<8x128xf32>
    %c1 = arith.constant 1 : index
    %c0_6 = arith.constant 0 : index
    %8 = vector.load %arg5[%c1, %c0_6] : memref<2x128xf32, #tpu.memory_space<vmem>>, vector<1x128xf32>
    %9 = vector.broadcast %8 : vector<1x128xf32> to vector<8x128xf32>
    %10 = arith.mulf %7, %9 : vector<8x128xf32>
    %cst_7 = arith.constant dense<0.000000e+00> : vector<8xf32>
    %11 = vector.multi_reduction <add>, %10, %cst_7 [1] : vector<8x128xf32> to vector<8xf32>
    %12 = vector.shape_cast %11 : vector<8xf32> to vector<8x1xf32>
    %c0_8 = arith.constant 0 : index
    %c0_9 = arith.constant 0 : index
    %13 = memref.load %arg6[%c0_8, %c0_9] : memref<1x1xf32, #tpu.memory_space<smem>>
    %14 = vector.broadcast %13 : f32 to vector<8x1xf32>
    %15 = arith.addf %12, %14 : vector<8x1xf32>
    %c0_10 = arith.constant 0 : index
    %c0_11 = arith.constant 0 : index
    %16 = vector.load %arg7[%c0_10, %c0_11] : memref<8x1xf32, #tpu.memory_space<vmem>>, vector<8x1xf32>
    tpu.vector_store %arg7[%c0_10, %c0_11], %15 {strides = array<i32>} : memref<8x1xf32, #tpu.memory_space<vmem>>, vector<8x1xf32>,
    %c0_12 = arith.constant 0 : index
    %c0_13 = arith.constant 0 : index
    %17 = vector.load %arg2[%c0_12, %c0_13] : memref<8x1xf32, #tpu.memory_space<vmem>>, vector<8x1xf32>
    %cst_14 = arith.constant 0.000000e+00 : f32
    %18 = vector.broadcast %cst_14 : f32 to vector<8x1xf32>
    %19 = arith.maximumf %15, %18 : vector<8x1xf32>
    %20 = arith.mulf %15, %17 : vector<8x1xf32>
    %21 = arith.subf %19, %20 : vector<8x1xf32>
    %22 = math.absf %15 : vector<8x1xf32>
    %cst_15 = arith.constant 0.000000e+00 : f32
    %23 = vector.broadcast %cst_15 : f32 to vector<8x1xf32>
    %24 = arith.subf %23, %22 : vector<8x1xf32>
    %25 = math.exp %24 : vector<8x1xf32>
    %26 = math.log1p %25 : vector<8x1xf32>
    %27 = arith.addf %21, %26 : vector<8x1xf32>
    %c0_16 = arith.constant 0 : index
    %c0_17 = arith.constant 0 : index
    %28 = vector.load %arg3[%c0_16, %c0_17] : memref<8x1xf32, #tpu.memory_space<vmem>>, vector<8x1xf32>
    %29 = arith.mulf %27, %28 : vector<8x1xf32>
    %c0_18 = arith.constant 0 : index
    %c0_19 = arith.constant 0 : index
    %30 = vector.load %arg8[%c0_18, %c0_19] : memref<8x1xf32, #tpu.memory_space<vmem>>, vector<8x1xf32>
    tpu.vector_store %arg8[%c0_18, %c0_19], %29 {strides = array<i32>} : memref<8x1xf32, #tpu.memory_space<vmem>>, vector<8x1xf32>,
    return
  }
  func.func @transform_0(%arg0: i32) -> (i32, i32) {
    %c0_i32 = arith.constant 0 : i32
    %c0_i32_0 = arith.constant 0 : i32
    return %arg0, %c0_i32 : i32, i32
  }
  func.func @transform_1(%arg0: i32) -> (i32, i32) {
    %c0_i32 = arith.constant 0 : i32
    %c0_i32_0 = arith.constant 0 : i32
    return %arg0, %c0_i32 : i32, i32
  }
  func.func @transform_2(%arg0: i32) -> (i32, i32) {
    %c0_i32 = arith.constant 0 : i32
    %c0_i32_0 = arith.constant 0 : i32
    return %arg0, %c0_i32 : i32, i32
  }
  func.func @transform_3(%arg0: i32) -> (i32, i32) {
    %c0_i32 = arith.constant 0 : i32
    %c0_i32_0 = arith.constant 0 : i32
    %c0_i32_1 = arith.constant 0 : i32
    return %c0_i32, %c0_i32_0 : i32, i32
  }
  func.func @transform_4(%arg0: i32) -> (i32, i32) {
    %c0_i32 = arith.constant 0 : i32
    %c0_i32_0 = arith.constant 0 : i32
    %c0_i32_1 = arith.constant 0 : i32
    return %c0_i32, %c0_i32_0 : i32, i32
  }
  func.func @transform_5(%arg0: i32) -> (i32, i32) {
    %c0_i32 = arith.constant 0 : i32
    %c0_i32_0 = arith.constant 0 : i32
    %c0_i32_1 = arith.constant 0 : i32
    return %c0_i32, %c0_i32_0 : i32, i32
  }
  func.func @transform_6(%arg0: i32) -> (i32, i32) {
    %c0_i32 = arith.constant 0 : i32
    %c0_i32_0 = arith.constant 0 : i32
    return %arg0, %c0_i32 : i32, i32
  }
  func.func @transform_7(%arg0: i32) -> (i32, i32) {
    %c0_i32 = arith.constant 0 : i32
    %c0_i32_0 = arith.constant 0 : i32
    return %arg0, %c0_i32 : i32, i32
  }
}

</mosaic_0001>

<llo_original>
// kernel: bow_forward.1
$region0: #{bow_forward.1}
  #allocation0 [shape = 'u32[]', space=smem, size = 0x4, offset = 0x4, fixed_abs, tag = 'smem constant byte address 0x4 - core index']
  #allocation1 [shape = 'u32[144,128]{1,0:T(1,128)}', space=vmem, size = 0x12000, scoped, tag = 'internal scratch']
  #allocation2 [shape = 'f32[1,1]{1,0:T(1,128)S(6)}', space=smem, size = 0x200, scoped, tag = 'scoped memory for bow_forward.1']
  %s0 = inlined_call_operand.vmem [shape: f32[8,384], index: 0, kind: input, shape index: {}]
  %s1 = inlined_call_operand.vmem [shape: f32[8,1], index: 1, kind: input, shape index: {}]
  %s2 = inlined_call_operand.vmem [shape: f32[8,1], index: 2, kind: input, shape index: {}]
  %s3 = inlined_call_operand.vmem [shape: f32[384,128], index: 3, kind: input, shape index: {}]
  %s4 = inlined_call_operand.vmem [shape: f32[2,128], index: 4, kind: input, shape index: {}]
  %s5 = inlined_call_operand.<no memory space> [shape: f32[1,1], index: 5, kind: input, shape index: {}]
  %s6 = inlined_call_operand.vmem [shape: f32[8,1], index: 6, kind: output, shape index: {0}]
  %s7 = inlined_call_operand.vmem [shape: f32[8,1], index: 7, kind: output, shape index: {1}]
  %8 = xla_tuple %s6, %s7
  %s9 = sld [smem:[#allocation0]]
  $region42: #{bow_forward.1} parent=0
    _
  %s11 = ssub.s32 1, %s9
  %s12 = scalar_select 0, %s11, %s9
  %13 = sst [smem:[#allocation2]] %s5
  // Predicated region
  $region2: #{bow_forward.1} parent=0 // pred_check
    _
  $region3: #{bow_forward.1} parent=0 // pred_check_branch
    %15 = sbr.rel (0) target = $region5
  $region4: #{bow_forward.1} parent=0 // pred_region
    _
  $region5: #{bow_forward.1} parent=0 // pred_fallthru
    _
  // Predicated region
  $region6: #{bow_forward.1} parent=0 // pred_check
    _
  $region7: #{bow_forward.1} parent=0 // pred_check_branch
    %17 = sbr.rel (0) target = $region9
  $region8: #{bow_forward.1} parent=0 // pred_region
    _
  $region9: #{bow_forward.1} parent=0 // pred_fallthru
    _
  // Predicated region
  $region10: #{bow_forward.1} parent=0 // pred_check
    _
  $region11: #{bow_forward.1} parent=0 // pred_check_branch
    %19 = sbr.rel (0) target = $region13
  $region12: #{bow_forward.1} parent=0 // pred_region
    _
  $region13: #{bow_forward.1} parent=0 // pred_fallthru
    _
  // Predicated region
  $region14: #{bow_forward.1} parent=0 // pred_check
    _
  $region15: #{bow_forward.1} parent=0 // pred_check_branch
    %21 = sbr.rel (0) target = $region17
  $region16: #{bow_forward.1} parent=0 // pred_region
    _
  $region17: #{bow_forward.1} parent=0 // pred_fallthru
    _
  // Predicated region
  $region18: #{bow_forward.1} parent=0 // pred_check
    _
  $region19: #{bow_forward.1} parent=0 // pred_check_branch
    %23 = sbr.rel (0) target = $region21
  $region20: #{bow_forward.1} parent=0 // pred_region
    _
  $region21: #{bow_forward.1} parent=0 // pred_fallthru
    _
  // Predicated region
  $region22: #{bow_forward.1} parent=0 // pred_check
    _
  $region23: #{bow_forward.1} parent=0 // pred_check_branch
    %25 = sbr.rel (0) target = $region25
  $region24: #{bow_forward.1} parent=0 // pred_region
    _
  $region25: #{bow_forward.1} parent=0 // pred_fallthru
    _
  %v26 = vld [vmem:[%s0] sm:$0xff]
  %v27 = vld [vmem:[%s0 + $0x8] sm:$0xff]
  %v28 = vld [vmem:[%s0 + $0x10] sm:$0xff]
  %v29 = vld [vmem:[%s3] sm:$0xff]
  %v30 = vld [vmem:[%s3 + $0x8] sm:$0xff]
  %v31 = vld [vmem:[%s3 + $0x10] sm:$0xff]
  %v32 = vld [vmem:[%s3 + $0x18] sm:$0xff]
  %v33 = vld [vmem:[%s3 + $0x20] sm:$0xff]
  %v34 = vld [vmem:[%s3 + $0x28] sm:$0xff]
  %v35 = vld [vmem:[%s3 + $0x30] sm:$0xff]
  %v36 = vld [vmem:[%s3 + $0x38] sm:$0xff]
  %v37 = vld [vmem:[%s3 + $0x40] sm:$0xff]
  %v38 = vld [vmem:[%s3 + $0x48] sm:$0xff]
  %v39 = vld [vmem:[%s3 + $0x50] sm:$0xff]
  %v40 = vld [vmem:[%s3 + $0x58] sm:$0xff]
  %v41 = vld [vmem:[%s3 + $0x60] sm:$0xff]
  %v42 = vld [vmem:[%s3 + $0x68] sm:$0xff]
  %v43 = vld [vmem:[%s3 + $0x70] sm:$0xff]
  %v44 = vld [vmem:[%s3 + $0x78] sm:$0xff]
  %v45 = vld [vmem:[%s3 + $0x80] sm:$0xff]
  %v46 = vld [vmem:[%s3 + $0x88] sm:$0xff]
  %v47 = vld [vmem:[%s3 + $0x90] sm:$0xff]
  %v48 = vld [vmem:[%s3 + $0x98] sm:$0xff]
  %v49 = vld [vmem:[%s3 + $0xa0] sm:$0xff]
  %v50 = vld [vmem:[%s3 + $0xa8] sm:$0xff]
  %v51 = vld [vmem:[%s3 + $0xb0] sm:$0xff]
  %v52 = vld [vmem:[%s3 + $0xb8] sm:$0xff]
  %v53 = vld [vmem:[%s3 + $0xc0] sm:$0xff]
  %v54 = vld [vmem:[%s3 + $0xc8] sm:$0xff]
  %v55 = vld [vmem:[%s3 + $0xd0] sm:$0xff]
  %v56 = vld [vmem:[%s3 + $0xd8] sm:$0xff]
  %v57 = vld [vmem:[%s3 + $0xe0] sm:$0xff]
  %v58 = vld [vmem:[%s3 + $0xe8] sm:$0xff]
  %v59 = vld [vmem:[%s3 + $0xf0] sm:$0xff]
  %v60 = vld [vmem:[%s3 + $0xf8] sm:$0xff]
  %v61 = vld [vmem:[%s3 + $0x100] sm:$0xff]
  %v62 = vld [vmem:[%s3 + $0x108] sm:$0xff]
  %v63 = vld [vmem:[%s3 + $0x110] sm:$0xff]
  %v64 = vld [vmem:[%s3 + $0x118] sm:$0xff]
  %v65 = vld [vmem:[%s3 + $0x120] sm:$0xff]
  %v66 = vld [vmem:[%s3 + $0x128] sm:$0xff]
  %v67 = vld [vmem:[%s3 + $0x130] sm:$0xff]
  %v68 = vld [vmem:[%s3 + $0x138] sm:$0xff]
  %v69 = vld [vmem:[%s3 + $0x140] sm:$0xff]
  %v70 = vld [vmem:[%s3 + $0x148] sm:$0xff]
  %v71 = vld [vmem:[%s3 + $0x150] sm:$0xff]
  %v72 = vld [vmem:[%s3 + $0x158] sm:$0xff]
  %v73 = vld [vmem:[%s3 + $0x160] sm:$0xff]
  %v74 = vld [vmem:[%s3 + $0x168] sm:$0xff]
  %v75 = vld [vmem:[%s3 + $0x170] sm:$0xff]
  %v76 = vld [vmem:[%s3 + $0x178] sm:$0xff]
  %v77 = vld [vmem:[%s4] sm:$0x1]
  %v78 = vlaneseq
  %v79 = vshrl.u32 %v78, 7
  %v80 = vsub.s32 0, %v79
  %v81 = vrot.slane %v77, %v80
  %82 = vmatprep.subr.mxu0 0.0
  %83 = vmatpush1.msra.mxu0 %v44
  %84 = vmatprep.subr.mxu0 0.0
  %85 = vmatpush1.msra.mxu0 %v43
  %86 = vmatprep.subr.mxu0 0.0
  %87 = vmatpush1.msra.mxu0 %v42
  %88 = vmatprep.subr.mxu0 0.0
  %89 = vmatpush1.msra.mxu0 %v41
  %90 = vmatprep.subr.mxu0 0.0
  %91 = vmatpush1.msra.mxu0 %v40
  %92 = vmatprep.subr.mxu0 0.0
  %93 = vmatpush1.msra.mxu0 %v39
  %94 = vmatprep.subr.mxu0 0.0
  %95 = vmatpush1.msra.mxu0 %v38
  %96 = vmatprep.subr.mxu0 0.0
  %97 = vmatpush1.msra.mxu0 %v37
  %98 = vmatprep.subr.mxu0 0.0
  %99 = vmatpush1.msra.mxu0 %v36
  %100 = vmatprep.subr.mxu0 0.0
  %101 = vmatpush1.msra.mxu0 %v35
  %102 = vmatprep.subr.mxu0 0.0
  %103 = vmatpush1.msra.mxu0 %v34
  %104 = vmatprep.subr.mxu0 0.0
  %105 = vmatpush1.msra.mxu0 %v33
  %106 = vmatprep.subr.mxu0 0.0
  %107 = vmatpush1.msra.mxu0 %v32
  %108 = vmatprep.subr.mxu0 0.0
  %109 = vmatpush1.msra.mxu0 %v31
  %110 = vmatprep.subr.mxu0 0.0
  %111 = vmatpush1.msra.mxu0 %v30
  %112 = vmatprep.subr.mxu0 0.0
  %113 = vmatpush1.msra.mxu0 %v29
  %114 = vmatprep.subr.mxu0 0.0
  %115 = vmatpush2.msra.mxu0 %v60
  %116 = vmatprep.subr.mxu0 0.0
  %117 = vmatpush2.msra.mxu0 %v59
  %118 = vmatprep.subr.mxu0 0.0
  %119 = vmatpush2.msra.mxu0 %v58
  %120 = vmatprep.subr.mxu0 0.0
  %121 = vmatpush2.msra.mxu0 %v57
  %122 = vmatprep.subr.mxu0 0.0
  %123 = vmatpush2.msra.mxu0 %v56
  %124 = vmatprep.subr.mxu0 0.0
  %125 = vmatpush2.msra.mxu0 %v55
  %126 = vmatprep.subr.mxu0 0.0
  %127 = vmatpush2.msra.mxu0 %v54
  %128 = vmatprep.subr.mxu0 0.0
  %129 = vmatpush2.msra.mxu0 %v53
  %130 = vmatprep.subr.mxu0 0.0
  %131 = vmatpush2.msra.mxu0 %v52
  %132 = vmatprep.subr.mxu0 0.0
  %133 = vmatpush2.msra.mxu0 %v51
  %134 = vmatprep.subr.mxu0 0.0
  %135 = vmatpush2.msra.mxu0 %v50
  %136 = vmatprep.subr.mxu0 0.0
  %137 = vmatpush2.msra.mxu0 %v49
  %138 = vmatprep.subr.mxu0 0.0
  %139 = vmatpush2.msra.mxu0 %v48
  %140 = vmatprep.subr.mxu0 0.0
  %141 = vmatpush2.msra.mxu0 %v47
  %142 = vmatprep.subr.mxu0 0.0
  %143 = vmatpush2.msra.mxu0 %v46
  %144 = vmatprep.subr.mxu0 0.0
  %145 = vmatpush2.msra.mxu0 %v45
  %146 = vmatprep.mubr.f32.mxu0 %v27
  %147 = vmatmul.mubr.f32.gmra.mxu0 %v26
  %v148 = vpop.f32.mrf.mxu0
  %v149 = vadd.f32 %v81, %v148
  %v150 = vpop.f32.mrf.mxu0
  %151 = vdwg.mxu0
  %152 = vmatprep.subr.mxu0 0.0
  %153 = vmatpush1.msra.mxu0 %v76
  %154 = vmatprep.subr.mxu0 0.0
  %155 = vmatpush1.msra.mxu0 %v75
  %156 = vmatprep.subr.mxu0 0.0
  %157 = vmatpush1.msra.mxu0 %v74
  %158 = vmatprep.subr.mxu0 0.0
  %159 = vmatpush1.msra.mxu0 %v73
  %160 = vmatprep.subr.mxu0 0.0
  %161 = vmatpush1.msra.mxu0 %v72
  %162 = vmatprep.subr.mxu0 0.0
  %163 = vmatpush1.msra.mxu0 %v71
  %164 = vmatprep.subr.mxu0 0.0
  %165 = vmatpush1.msra.mxu0 %v70
  %166 = vmatprep.subr.mxu0 0.0
  %167 = vmatpush1.msra.mxu0 %v69
  %168 = vmatprep.subr.mxu0 0.0
  %169 = vmatpush1.msra.mxu0 %v68
  %170 = vmatprep.subr.mxu0 0.0
  %171 = vmatpush1.msra.mxu0 %v67
  %172 = vmatprep.subr.mxu0 0.0
  %173 = vmatpush1.msra.mxu0 %v66
  %174 = vmatprep.subr.mxu0 0.0
  %175 = vmatpush1.msra.mxu0 %v65
  %176 = vmatprep.subr.mxu0 0.0
  %177 = vmatpush1.msra.mxu0 %v64
  %178 = vmatprep.subr.mxu0 0.0
  %179 = vmatpush1.msra.mxu0 %v63
  %180 = vmatprep.subr.mxu0 0.0
  %181 = vmatpush1.msra.mxu0 %v62
  %182 = vmatprep.subr.mxu0 0.0
  %183 = vmatpush1.msra.mxu0 %v61
  %184 = vmatprep.subr.mxu0 0.0
  %185 = vmatpush2.msra.mxu0 0.0
  %186 = vmatprep.subr.mxu0 0.0
  %187 = vmatpush2.msra.mxu0 0.0
  %188 = vmatprep.subr.mxu0 0.0
  %189 = vmatpush2.msra.mxu0 0.0
  %190 = vmatprep.subr.mxu0 0.0
  %191 = vmatpush2.msra.mxu0 0.0
  %192 = vmatprep.subr.mxu0 0.0
  %193 = vmatpush2.msra.mxu0 0.0
  %194 = vmatprep.subr.mxu0 0.0
  %195 = vmatpush2.msra.mxu0 0.0
  %196 = vmatprep.subr.mxu0 0.0
  %197 = vmatpush2.msra.mxu0 0.0
  %198 = vmatprep.subr.mxu0 0.0
  %199 = vmatpush2.msra.mxu0 0.0
  %200 = vmatprep.subr.mxu0 0.0
  %201 = vmatpush2.msra.mxu0 0.0
  %202 = vmatprep.subr.mxu0 0.0
  %203 = vmatpush2.msra.mxu0 0.0
  %204 = vmatprep.subr.mxu0 0.0
  %205 = vmatpush2.msra.mxu0 0.0
  %206 = vmatprep.subr.mxu0 0.0
  %207 = vmatpush2.msra.mxu0 0.0
  %208 = vmatprep.subr.mxu0 0.0
  %209 = vmatpush2.msra.mxu0 0.0
  %210 = vmatprep.subr.mxu0 0.0
  %211 = vmatpush2.msra.mxu0 0.0
  %212 = vmatprep.subr.mxu0 0.0
  %213 = vmatpush2.msra.mxu0 0.0
  %214 = vmatprep.subr.mxu0 0.0
  %215 = vmatpush2.msra.mxu0 0.0
  %216 = vmatprep.mubr.f32.mxu0 0.0
  %217 = vmatmul.mubr.f32.gmra.mxu0 %v28
  %v218 = vpop.f32.mrf.mxu0
  %v219 = vadd.f32 %v149, %v218
  %v220 = vpop.f32.mrf.mxu0
  %221 = vdwg.mxu0
  %v222 = vmax.f32 %v219, 0.0
  %v223 = vld [vmem:[%s4 + $0x1] sm:$0x1]
  %v224 = vlaneseq
  %v225 = vshrl.u32 %v224, 7
  %v226 = vsub.s32 0, %v225
  %v227 = vrot.slane %v223, %v226
  %v228 = vmul.f32 %v222, %v227
  %229 = vadd.xlane.f32.xlu0 %v228
  %v230 = vpop.xlane.xlu0 %229
  %s231 = sld [smem:[#allocation2]]
  %v232 = vstv %s231
  %v233 = vadd.f32 %v230, %v232
  %vm234 = vcmask 7168
  %235 = vst.msk [vmem:[%s6] sm:$0xff] %vm234, %v233
  %v236 = vld [vmem:[%s1] sm:$0xff]
  %v237 = vmax.f32 %v233, 0.0
  %v238 = vmul.f32 %v233, %v236
  %v239 = vsub.f32 %v237, %v238
  %v240 = vand.u32 2147483647, %v233
  %v241 = vsub.f32 0.0, %v240
  %v242 = vmul.f32 %v241, 1.442695
  %v243 = vpow.pop %v242
  %v244 = vadd.f32 %v243, 1.0
  %v245 = vlog2.pop %v244
  %v246 = vmul.f32 %v245, 0.6931472
  %v247 = vmul.f32 -0.5, %v243
  %v248 = vadd.f32 %v247, 1.0
  %v249 = vmul.f32 %v248, %v243
  %v250 = vand.u32 2147483647, %v243
  %vm251 = vcmp.lt.f32.partialorder %v250, 0.0004427343
  %v252 = vsel %vm251, %v249, %v246
  %v253 = vadd.f32 %v239, %v252
  %v254 = vld [vmem:[%s2] sm:$0xff]
  %v255 = vmul.f32 %v253, %v254
  %256 = vst.msk [vmem:[%s7] sm:$0xff] %vm234, %v255
  // Predicated region
  $region26: #{bow_forward.1} parent=0 // pred_check
    _
  $region27: #{bow_forward.1} parent=0 // pred_check_branch
    %258 = sbr.rel (0) target = $region29
  $region28: #{bow_forward.1} parent=0 // pred_region
    _
  $region29: #{bow_forward.1} parent=0 // pred_fallthru
    _
  // Predicated region
  $region30: #{bow_forward.1} parent=0 // pred_check
    _
  $region31: #{bow_forward.1} parent=0 // pred_check_branch
    %260 = sbr.rel (0) target = $region33
  $region32: #{bow_forward.1} parent=0 // pred_region
    _
  $region33: #{bow_forward.1} parent=0 // pred_fallthru
    _
  // Predicated region
  $region34: #{bow_forward.1} parent=0 // pred_check
    _
  $region35: #{bow_forward.1} parent=0 // pred_check_branch
    %262 = sbr.rel (0) target = $region37
  $region36: #{bow_forward.1} parent=0 // pred_region
    _
  $region37: #{bow_forward.1} parent=0 // pred_fallthru
    _
  // Predicated region
  $region38: #{bow_forward.1} parent=0 // pred_check
    _
  $region39: #{bow_forward.1} parent=0 // pred_check_branch
    %264 = sbr.rel (0) target = $region41
  $region40: #{bow_forward.1} parent=0 // pred_region
    _
  $region41: #{bow_forward.1} parent=0 // pred_fallthru
    _

</llo_original>
